<compile_context>
chip_gen: v6e
topology: v6e:2x2x1
jax: 0.10.0
libtpu: 0.0.40
codegen_flags: <defaults>
</compile_context>

<pallas_src>
import math

import jax
import jax.numpy as jnp
from jax.experimental import pallas as pl
from jax.experimental.pallas import tpu as pltpu

H2 = int(math.sqrt(180 * 5))    # 30   (matches int(np.sqrt(180*5)) in the spec)
A2 = int(math.sqrt(180 * 60))   # 103  (matches int(np.sqrt(180*60)), truncated)

V_DIMS = [(18, 180), (180, H2), (H2, 5), (5, 1)]
A_DIMS = [(18, 180), (180, A2), (A2, 60), (60, 6)]   # alpha head
B_DIMS = [(18, 180), (180, A2), (A2, 60), (60, 6)]   # beta head

# -------- packed-slab layout (head order v | alpha | beta, lanes = last axis)
# W0   (18, 540)  bf16 : fused layer-0 weight; out lanes v 0:180 | a 180:360 | b 360:540
# W1bd (540, 236) bf16 : block-diag layer-1 ;  out lanes v 0:30  | a 30:133  | b 133:236
# W2bd (236, 125) bf16 : block-diag layer-2 ;  out lanes v 0:5   | a 5:65    | b 65:125
# W3bd (125, 13)  bf16 : block-diag layer-3 ;  out lanes v 0:1   | a 1:7     | b 7:13
# BIAS (4, 540)   f32  : row l = layer-l biases packed [v|a|b], zero-padded to 540
# OUT  (B, 13)    f32  : v 0:1 | alpha 1:7 | beta 7:13


def pponet_kernel(x_ref, w0_ref, w1_ref, w2_ref, w3_ref, b_ref, out_ref):
    f32 = jnp.float32
    bf16 = jnp.bfloat16
    x = x_ref[...].astype(bf16)          # (bb, 18) -> bf16 MXU operand
    b = b_ref[...]                       # (4, 540) f32 -- loaded once, reused below

    # layer 0: fused across the three heads -> (bb, 540)
    h = jnp.tanh(jnp.dot(x, w0_ref[...], preferred_element_type=f32) + b[0:1, 0:540])
    # layer 1: block-diagonal, single lane-aligned matmul -> (bb, 236)
    h = jnp.tanh(jnp.dot(h.astype(bf16), w1_ref[...], preferred_element_type=f32)
                 + b[1:2, 0:236])
    # layer 2: block-diagonal -> (bb, 125)
    h = jnp.tanh(jnp.dot(h.astype(bf16), w2_ref[...], preferred_element_type=f32)
                 + b[2:3, 0:125])
    # layer 3: block-diagonal -> (bb, 13), already in packed output order
    h = jnp.dot(h.astype(bf16), w3_ref[...], preferred_element_type=f32) + b[3:4, 0:13]

    # per-head output transform: lane 0 = v (identity), lanes 1:13 = softplus + 1
    lane = jax.lax.broadcasted_iota(jnp.int32, h.shape, dimension=1)
    out_ref[...] = jnp.where(lane == 0, h, jax.nn.softplus(h) + 1.0).astype(out_ref.dtype)


# ---------------------------------------------------------------------------
# parameter init / packing
# ---------------------------------------------------------------------------
def _init_head(key, dims):
    """PyTorch-default nn.Linear init: U(-1/sqrt(fan_in), 1/sqrt(fan_in))."""
    ws, bs = [], []
    for (fi, fo) in dims:
        key, kw, kb = jax.random.split(key, 3)
        bound = 1.0 / math.sqrt(fi)
        ws.append(jax.random.uniform(kw, (fi, fo), jnp.float32, -bound, bound))
        bs.append(jax.random.uniform(kb, (fo,), jnp.float32, -bound, bound))
    return ws, bs


def init_params(key):
    kv, ka, kb = jax.random.split(key, 3)
    return (_init_head(kv, V_DIMS), _init_head(ka, A_DIMS), _init_head(kb, B_DIMS))


def _block_diag(blocks):
    rows = sum(blk.shape[0] for blk in blocks)
    cols = sum(blk.shape[1] for blk in blocks)
    out = jnp.zeros((rows, cols), jnp.float32)
    r = c = 0
    for blk in blocks:
        out = out.at[r:r + blk.shape[0], c:c + blk.shape[1]].set(blk)
        r += blk.shape[0]
        c += blk.shape[1]
    return out


def pack_params(params):
    """Pack the 12 weights + 12 biases into 4 bf16 weight slabs + 1 f32 bias slab."""
    (vw, vb), (aw, ab), (bw, bb_) = params
    bf16 = jnp.bfloat16

    w0 = jnp.concatenate([vw[0], aw[0], bw[0]], axis=1).astype(bf16)   # (18, 540)
    w1 = _block_diag([vw[1], aw[1], bw[1]]).astype(bf16)               # (540, 236)
    w2 = _block_diag([vw[2], aw[2], bw[2]]).astype(bf16)               # (236, 125)
    w3 = _block_diag([vw[3], aw[3], bw[3]]).astype(bf16)               # (125, 13)

    def bias_row(parts, width=540):
        row = jnp.concatenate(parts, axis=0)
        return jnp.pad(row, (0, width - row.shape[0]))

    biases = jnp.stack([
        bias_row([vb[0], ab[0], bb_[0]]),
        bias_row([vb[1], ab[1], bb_[1]]),
        bias_row([vb[2], ab[2], bb_[2]]),
        bias_row([vb[3], ab[3], bb_[3]]),
    ])                                                                  # (4, 540) f32
    return w0, w1, w2, w3, biases


# ---------------------------------------------------------------------------
# forward
# ---------------------------------------------------------------------------
def pponet_forward(x, packed, block_b=1024):
    """x: (B, 18) f32.  Returns ((alpha, beta), v) exactly like the PyTorch module."""
    w0, w1, w2, w3, biases = packed
    B = x.shape[0]
    bb = min(block_b, B)
    bb = max(8, ((bb + 7) // 8) * 8)          # second-to-last block dim must be % 8
    n_blocks = pl.cdiv(B, bb)
    Bp = n_blocks * bb
    if Bp != B:
        x = jnp.pad(x, ((0, Bp - B), (0, 0)))  # tail-only pad (no full-array concat)

    const = lambda i: (0, 0)                   # weight/bias slabs resident across tiles
    out = pl.pallas_call(
        pponet_kernel,
        out_shape=jax.ShapeDtypeStruct((Bp, 13), jnp.float32),
        grid_spec=pltpu.PrefetchScalarGridSpec(
            num_scalar_prefetch=0,
            grid=(n_blocks,),
            in_specs=[
                pl.BlockSpec((bb, 18), lambda i: (i, 0)),      # x: tiled over batch
                pl.BlockSpec((18, 540), const),                # W0
                pl.BlockSpec((540, 236), const),               # W1 block-diag
                pl.BlockSpec((236, 125), const),               # W2 block-diag
                pl.BlockSpec((125, 13), const),                # W3 block-diag
                pl.BlockSpec((4, 540), const),                 # biases
            ],
            out_specs=pl.BlockSpec((bb, 13), lambda i: (i, 0)),
        ),
        compiler_params=pltpu.CompilerParams(
            dimension_semantics=("parallel",)),
    )(x, w0, w1, w2, w3, biases)

    out = out[:B]
    v = out[:, 0:1]
    alpha = out[:, 1:7]
    beta = out[:, 7:13]
    return (alpha, beta), v


def pponet_forward_ref(x, params):
    """Pure-JAX f32 reference (unpacked params) for correctness checking."""
    (vw, vb), (aw, ab), (bw, bb_) = params

    def head(h, ws, bs):
        for i in range(4):
            h = h @ ws[i] + bs[i]
            if i < 3:
                h = jnp.tanh(h)
        return h

    v = head(x, vw, vb)
    alpha = jax.nn.softplus(head(x, aw, ab)) + 1.0
    beta = jax.nn.softplus(head(x, bw, bb_)) + 1.0
    return (alpha, beta), v


if __name__ == "__main__":
    key = jax.random.PRNGKey(0)
    kx, kp = jax.random.split(key)

    B = 8
    x = jax.random.normal(kx, (B, 18), dtype=jnp.float32)
    params = init_params(kp)
    packed = pack_params(params)

    (alpha, beta), v = pponet_forward(x, packed)
    jax.block_until_ready((alpha, beta, v))

    (alpha_r, beta_r), v_r = pponet_forward_ref(x, params)
    assert alpha.shape == (B, 6) and beta.shape == (B, 6) and v.shape == (B, 1)
    # bf16 MXU operands -> compare against the f32 reference at bf16-level tolerance
    assert jnp.allclose(alpha, alpha_r, atol=5e-2, rtol=5e-2)
    assert jnp.allclose(beta, beta_r, atol=5e-2, rtol=5e-2)
    assert jnp.allclose(v, v_r, atol=5e-2, rtol=5e-2)

    print("KERNEL_OK")
</pallas_src>

<mosaic_0001>
module attributes {stable_mosaic.version = 11 : i64} {
  func.func @pponet_kernel(%arg0: i32, %arg1: memref<8x18xf32, #tpu.memory_space<vmem>>, %arg2: memref<18x540xbf16, #tpu.memory_space<vmem>>, %arg3: memref<540x236xbf16, #tpu.memory_space<vmem>>, %arg4: memref<236x125xbf16, #tpu.memory_space<vmem>>, %arg5: memref<125x13xbf16, #tpu.memory_space<vmem>>, %arg6: memref<4x540xf32, #tpu.memory_space<vmem>>, %arg7: memref<8x13xf32, #tpu.memory_space<vmem>>) attributes {dimension_semantics = [#tpu.dimension_semantics<parallel>], iteration_bounds = array<i64: 1>, scalar_prefetch = 0 : i64, scratch_operands = 0 : i64, tpu.core_type = #tpu.core_type<tc>, window_params = [{transform_indices = @transform_0, window_bounds = array<i64: 8, 18>}, {pipeline_mode = #tpu.pipeline_mode<synchronous>, transform_indices = @transform_1, window_bounds = array<i64: 18, 540>}, {pipeline_mode = #tpu.pipeline_mode<synchronous>, transform_indices = @transform_2, window_bounds = array<i64: 540, 236>}, {pipeline_mode = #tpu.pipeline_mode<synchronous>, transform_indices = @transform_3, window_bounds = array<i64: 236, 125>}, {pipeline_mode = #tpu.pipeline_mode<synchronous>, transform_indices = @transform_4, window_bounds = array<i64: 125, 13>}, {pipeline_mode = #tpu.pipeline_mode<synchronous>, transform_indices = @transform_5, window_bounds = array<i64: 4, 540>}, {transform_indices = @transform_6, window_bounds = array<i64: 8, 13>}]} {
    %c0 = arith.constant 0 : index
    %c0_0 = arith.constant 0 : index
    %0 = vector.load %arg1[%c0, %c0_0] : memref<8x18xf32, #tpu.memory_space<vmem>>, vector<8x18xf32>
    %1 = arith.truncf %0 : vector<8x18xf32> to vector<8x18xbf16>
    %c0_1 = arith.constant 0 : index
    %c0_2 = arith.constant 0 : index
    %2 = vector.load %arg6[%c0_1, %c0_2] : memref<4x540xf32, #tpu.memory_space<vmem>>, vector<4x540xf32>
    %c0_3 = arith.constant 0 : index
    %c0_4 = arith.constant 0 : index
    %3 = vector.load %arg2[%c0_3, %c0_4] : memref<18x540xbf16, #tpu.memory_space<vmem>>, vector<18x540xbf16>
    %cst = arith.constant dense<0.000000e+00> : vector<8x540xf32>
    %4 = tpu.matmul %1, %3, %cst {dimension_numbers = #tpu.dot_dimension_numbers<[1], [0], [0], [1], [0, 0, 1, 1], [], []>} : vector<8x18xbf16>, vector<18x540xbf16>, vector<8x540xf32> -> vector<8x540xf32>
    %5 = vector.extract_strided_slice %2 {offsets = [0, 0], sizes = [1, 540], strides = [1, 1]} : vector<4x540xf32> to vector<1x540xf32>
    %6 = vector.broadcast %5 : vector<1x540xf32> to vector<8x540xf32>
    %7 = arith.addf %4, %6 : vector<8x540xf32>
    %8 = math.tanh %7 : vector<8x540xf32>
    %9 = arith.truncf %8 : vector<8x540xf32> to vector<8x540xbf16>
    %c0_5 = arith.constant 0 : index
    %c0_6 = arith.constant 0 : index
    %10 = vector.load %arg3[%c0_5, %c0_6] : memref<540x236xbf16, #tpu.memory_space<vmem>>, vector<540x236xbf16>
    %cst_7 = arith.constant dense<0.000000e+00> : vector<8x236xf32>
    %11 = tpu.matmul %9, %10, %cst_7 {dimension_numbers = #tpu.dot_dimension_numbers<[1], [0], [0], [1], [0, 0, 1, 1], [], []>} : vector<8x540xbf16>, vector<540x236xbf16>, vector<8x236xf32> -> vector<8x236xf32>
    %12 = vector.extract_strided_slice %2 {offsets = [1, 0], sizes = [1, 236], strides = [1, 1]} : vector<4x540xf32> to vector<1x236xf32>
    %13 = vector.broadcast %12 : vector<1x236xf32> to vector<8x236xf32>
    %14 = arith.addf %11, %13 : vector<8x236xf32>
    %15 = math.tanh %14 : vector<8x236xf32>
    %16 = arith.truncf %15 : vector<8x236xf32> to vector<8x236xbf16>
    %c0_8 = arith.constant 0 : index
    %c0_9 = arith.constant 0 : index
    %17 = vector.load %arg4[%c0_8, %c0_9] : memref<236x125xbf16, #tpu.memory_space<vmem>>, vector<236x125xbf16>
    %cst_10 = arith.constant dense<0.000000e+00> : vector<8x125xf32>
    %18 = tpu.matmul %16, %17, %cst_10 {dimension_numbers = #tpu.dot_dimension_numbers<[1], [0], [0], [1], [0, 0, 1, 1], [], []>} : vector<8x236xbf16>, vector<236x125xbf16>, vector<8x125xf32> -> vector<8x125xf32>
    %19 = vector.extract_strided_slice %2 {offsets = [2, 0], sizes = [1, 125], strides = [1, 1]} : vector<4x540xf32> to vector<1x125xf32>
    %20 = vector.broadcast %19 : vector<1x125xf32> to vector<8x125xf32>
    %21 = arith.addf %18, %20 : vector<8x125xf32>
    %22 = math.tanh %21 : vector<8x125xf32>
    %23 = arith.truncf %22 : vector<8x125xf32> to vector<8x125xbf16>
    %c0_11 = arith.constant 0 : index
    %c0_12 = arith.constant 0 : index
    %24 = vector.load %arg5[%c0_11, %c0_12] : memref<125x13xbf16, #tpu.memory_space<vmem>>, vector<125x13xbf16>
    %cst_13 = arith.constant dense<0.000000e+00> : vector<8x13xf32>
    %25 = tpu.matmul %23, %24, %cst_13 {dimension_numbers = #tpu.dot_dimension_numbers<[1], [0], [0], [1], [0, 0, 1, 1], [], []>} : vector<8x125xbf16>, vector<125x13xbf16>, vector<8x13xf32> -> vector<8x13xf32>
    %26 = vector.extract_strided_slice %2 {offsets = [3, 0], sizes = [1, 13], strides = [1, 1]} : vector<4x540xf32> to vector<1x13xf32>
    %27 = vector.broadcast %26 : vector<1x13xf32> to vector<8x13xf32>
    %28 = arith.addf %25, %27 : vector<8x13xf32>
    %29 = tpu.iota {dimensions = array<i32: 1>} : vector<8x13xi32>
    %c0_i32 = arith.constant 0 : i32
    %30 = vector.broadcast %c0_i32 : i32 to vector<8x13xi32>
    %31 = arith.cmpi eq, %29, %30 : vector<8x13xi32>
    %cst_14 = arith.constant 0.000000e+00 : f32
    %32 = vector.broadcast %cst_14 : f32 to vector<8x13xf32>
    %33 = arith.maximumf %28, %32 : vector<8x13xf32>
    %34 = vector.broadcast %cst_14 : f32 to vector<8x13xf32>
    %35 = arith.subf %28, %34 : vector<8x13xf32>
    %36 = arith.cmpf one, %35, %35 : vector<8x13xf32>
    %37 = vector.broadcast %cst_14 : f32 to vector<8x13xf32>
    %38 = arith.addf %28, %37 : vector<8x13xf32>
    %39 = math.absf %35 : vector<8x13xf32>
    %cst_15 = arith.constant 0.000000e+00 : f32
    %40 = vector.broadcast %cst_15 : f32 to vector<8x13xf32>
    %41 = arith.subf %40, %39 : vector<8x13xf32>
    %42 = math.exp %41 : vector<8x13xf32>
    %43 = math.log1p %42 : vector<8x13xf32>
    %44 = arith.addf %33, %43 : vector<8x13xf32>
    %45 = arith.select %36, %38, %44 : vector<8x13xi1>, vector<8x13xf32>
    %cst_16 = arith.constant 1.000000e+00 : f32
    %46 = vector.broadcast %cst_16 : f32 to vector<8x13xf32>
    %47 = arith.addf %45, %46 : vector<8x13xf32>
    %48 = arith.select %31, %28, %47 : vector<8x13xi1>, vector<8x13xf32>
    %c0_17 = arith.constant 0 : index
    %c0_18 = arith.constant 0 : index
    %49 = vector.load %arg7[%c0_17, %c0_18] : memref<8x13xf32, #tpu.memory_space<vmem>>, vector<8x13xf32>
    tpu.vector_store %arg7[%c0_17, %c0_18], %48 {strides = array<i32>} : memref<8x13xf32, #tpu.memory_space<vmem>>, vector<8x13xf32>,
    return
  }
  func.func @transform_0(%arg0: i32) -> (i32, i32) {
    %c0_i32 = arith.constant 0 : i32
    %c0_i32_0 = arith.constant 0 : i32
    return %arg0, %c0_i32 : i32, i32
  }
  func.func @transform_1(%arg0: i32) -> (i32, i32) {
    %c0_i32 = arith.constant 0 : i32
    %c0_i32_0 = arith.constant 0 : i32
    %c0_i32_1 = arith.constant 0 : i32
    return %c0_i32, %c0_i32_0 : i32, i32
  }
  func.func @transform_2(%arg0: i32) -> (i32, i32) {
    %c0_i32 = arith.constant 0 : i32
    %c0_i32_0 = arith.constant 0 : i32
    %c0_i32_1 = arith.constant 0 : i32
    return %c0_i32, %c0_i32_0 : i32, i32
  }
  func.func @transform_3(%arg0: i32) -> (i32, i32) {
    %c0_i32 = arith.constant 0 : i32
    %c0_i32_0 = arith.constant 0 : i32
    %c0_i32_1 = arith.constant 0 : i32
    return %c0_i32, %c0_i32_0 : i32, i32
  }
  func.func @transform_4(%arg0: i32) -> (i32, i32) {
    %c0_i32 = arith.constant 0 : i32
    %c0_i32_0 = arith.constant 0 : i32
    %c0_i32_1 = arith.constant 0 : i32
    return %c0_i32, %c0_i32_0 : i32, i32
  }
  func.func @transform_5(%arg0: i32) -> (i32, i32) {
    %c0_i32 = arith.constant 0 : i32
    %c0_i32_0 = arith.constant 0 : i32
    %c0_i32_1 = arith.constant 0 : i32
    return %c0_i32, %c0_i32_0 : i32, i32
  }
  func.func @transform_6(%arg0: i32) -> (i32, i32) {
    %c0_i32 = arith.constant 0 : i32
    %c0_i32_0 = arith.constant 0 : i32
    return %arg0, %c0_i32 : i32, i32
  }
}

</mosaic_0001>

<llo_original>
// kernel: tpu_custom_call.1
$region0: #{tpu_custom_call.1}
  #allocation0 [shape = 'u32[]', space=smem, size = 0x4, offset = 0x4, fixed_abs, tag = 'smem constant byte address 0x4 - core index']
  #allocation1 [shape = 'u32[144,128]{1,0:T(1,128)}', space=vmem, size = 0x12000, scoped, tag = 'internal scratch']
  %s0 = inlined_call_operand.hbm [shape: f32[8,18], index: 0, kind: input, shape index: {}]
  %s1 = inlined_call_operand.vmem [shape: bf16[18,540], index: 1, kind: input, shape index: {}]
  %s2 = inlined_call_operand.hbm [shape: bf16[540,236], index: 2, kind: input, shape index: {}]
  %s3 = inlined_call_operand.hbm [shape: bf16[236,125], index: 3, kind: input, shape index: {}]
  %s4 = inlined_call_operand.vmem [shape: bf16[125,13], index: 4, kind: input, shape index: {}]
  %s5 = inlined_call_operand.vmem [shape: f32[4,540], index: 5, kind: input, shape index: {}]
  %s6 = inlined_call_operand.hbm [shape: f32[8,13], index: 6, kind: output, shape index: {}]
  %s7 = sld [smem:[#allocation0]]
  $region46: #{tpu_custom_call.1} parent=0
    _
  %s9 = ssub.s32 1, %s7
  %s10 = scalar_select 0, %s9, %s7
  $region1: #{tpu_custom_call.1} parent=0
    #allocation2 [shape = 'u8[4096]{0}', space=vmem, size = 0x1000, scoped, tag = 'input window, operand 0, single buffered']
    #allocation3 [shape = 's32[1]{0}', space=sflag, size = 0x4, scoped, tag = 'scoped memory for tpu_custom_call.1']
    #allocation4 [shape = 's32[1]{0}', space=sflag, size = 0x4, scoped, tag = 'scoped memory for tpu_custom_call.1']
    #allocation5 [shape = 'u8[278528]{0}', space=vmem, size = 0x44000, scoped, tag = 'input window, operand 2, single buffered']
    #allocation6 [shape = 's32[1]{0}', space=sflag, size = 0x4, scoped, tag = 'scoped memory for tpu_custom_call.1']
    #allocation7 [shape = 'u8[61440]{0}', space=vmem, size = 0xf000, scoped, tag = 'input window, operand 3, single buffered']
    #allocation8 [shape = 'u8[4096]{0}', space=vmem, size = 0x1000, scoped, tag = 'output window, operand 0, single buffered']
    %11 = vsyncpa [#allocation3], 0
    %12 = vsyncpa [#allocation6], 0
    %13 = vsyncpa [#allocation4], 0
    // Predicated region
    $region2: #{tpu_custom_call.1} parent=1 // pred_check
      _
    $region3: #{tpu_custom_call.1} parent=1 // pred_check_branch
      %15 = sbr.rel (0) target = $region5
    $region4: #{tpu_custom_call.1} parent=1 // pred_region
      %s17 = ssub.s32 128, 128
      %18 = vsyncadd [#allocation3], %s17
      %s20 = sshll.u32 [#allocation2], 4
      %s21 = int_to_ptr.vmem [resolvable:$true] %s20
      %23 = dma.hbm_to_vmem [thread:$0]  %s0, 128, %s21, [#allocation3]
    $region5: #{tpu_custom_call.1} parent=1 // pred_fallthru
      _
    // Predicated region
    $region6: #{tpu_custom_call.1} parent=1 // pred_check
      _
    $region7: #{tpu_custom_call.1} parent=1 // pred_check_branch
      %25 = sbr.rel (0) target = $region9
    $region8: #{tpu_custom_call.1} parent=1 // pred_region
      _
    $region9: #{tpu_custom_call.1} parent=1 // pred_fallthru
      _
    // Predicated region
    $region10: #{tpu_custom_call.1} parent=1 // pred_check
      _
    $region11: #{tpu_custom_call.1} parent=1 // pred_check_branch
      %27 = sbr.rel (0) target = $region13
    $region12: #{tpu_custom_call.1} parent=1 // pred_region
      %s29 = ssub.s32 8704, 8704
      %30 = vsyncadd [#allocation6], %s29
      %s31 = sshll.u32 [#allocation5], 4
      %s32 = int_to_ptr.vmem [resolvable:$true] %s31
      %37 = dma.hbm_to_vmem [thread:$0]  %s2, 8704, %s32, [#allocation6], 128, 128, 8
    $region13: #{tpu_custom_call.1} parent=1 // pred_fallthru
      _
    // Predicated region
    $region14: #{tpu_custom_call.1} parent=1 // pred_check
      _
    $region15: #{tpu_custom_call.1} parent=1 // pred_check_branch
      %39 = sbr.rel (0) target = $region17
    $region16: #{tpu_custom_call.1} parent=1 // pred_region
      %s41 = ssub.s32 1920, 1920
      %42 = vsyncadd [#allocation6], %s41
      %s43 = sshll.u32 [#allocation7], 4
      %s44 = int_to_ptr.vmem [resolvable:$true] %s43
      %49 = dma.hbm_to_vmem [thread:$0]  %s3, 1920, %s44, [#allocation6], 64, 64, 4
    $region17: #{tpu_custom_call.1} parent=1 // pred_fallthru
      _
    // Predicated region
    $region18: #{tpu_custom_call.1} parent=1 // pred_check
      _
    $region19: #{tpu_custom_call.1} parent=1 // pred_check_branch
      %51 = sbr.rel (0) target = $region21
    $region20: #{tpu_custom_call.1} parent=1 // pred_region
      _
    $region21: #{tpu_custom_call.1} parent=1 // pred_fallthru
      _
    // Predicated region
    $region22: #{tpu_custom_call.1} parent=1 // pred_check
      _
    $region23: #{tpu_custom_call.1} parent=1 // pred_check_branch
      %53 = sbr.rel (0) target = $region25
    $region24: #{tpu_custom_call.1} parent=1 // pred_region
      _
    $region25: #{tpu_custom_call.1} parent=1 // pred_fallthru
      _
    // Predicated region
    $region26: #{tpu_custom_call.1} parent=1 // pred_check
      _
    $region27: #{tpu_custom_call.1} parent=1 // pred_check_branch
      %55 = sbr.rel (0) target = $region29
    $region28: #{tpu_custom_call.1} parent=1 // pred_region
      %56 = dma.done [#allocation3], 128
    $region29: #{tpu_custom_call.1} parent=1 // pred_fallthru
      _
    // Predicated region
    $region30: #{tpu_custom_call.1} parent=1 // pred_check
      _
    $region31: #{tpu_custom_call.1} parent=1 // pred_check_branch
      %58 = sbr.rel (0) target = $region33
    $region32: #{tpu_custom_call.1} parent=1 // pred_region
      %59 = dma.done [#allocation6], 8704
    $region33: #{tpu_custom_call.1} parent=1 // pred_fallthru
      _
    // Predicated region
    $region34: #{tpu_custom_call.1} parent=1 // pred_check
      _
    $region35: #{tpu_custom_call.1} parent=1 // pred_check_branch
      %61 = sbr.rel (0) target = $region37
    $region36: #{tpu_custom_call.1} parent=1 // pred_region
      %62 = dma.done [#allocation6], 1920
    $region37: #{tpu_custom_call.1} parent=1 // pred_fallthru
      _
    %v64 = vld [vmem:[#allocation2] sm:$0xff]
    %v65 = vpack.c.bf16 %v64, %v64
    %v66 = vld [vmem:[%s5] sm:$0xff]
    %v67 = vld [vmem:[%s5 + $0x8] sm:$0xff]
    %v68 = vld [vmem:[%s5 + $0x10] sm:$0xf]
    %v69 = vld [vmem:[%s1] sm:$0xff]
    %v70 = vld [vmem:[%s1 + $0x8] sm:$0xff]
    %v71 = vld [vmem:[%s1 + $0x10] sm:$0xf]
    %v72 = vld [vmem:[%s1 + $0x14] sm:$0xff]
    %v73 = vld [vmem:[%s1 + $0x1c] sm:$0xff]
    %v74 = vld [vmem:[%s1 + $0x24] sm:$0xf]
    %v75 = vld [vmem:[%s1 + $0x28] sm:$0x11]
    %v76 = vld [vmem:[%s1 + $0x30] sm:$0x11]
    %v77 = vld [vmem:[%s1 + $0x38] sm:$0x1]
    %v81 = vlaneseq
    %v82 = vshrl.u32 %v81, 7
    %v83 = vsub.s32 0, %v82
    %v84 = vrot.slane %v66, %v83
    %v85 = vlaneseq
    %v86 = vshrl.u32 %v85, 7
    %v87 = vsub.s32 4, %v86
    %v88 = vrot.slane %v66, %v87
    %v89 = vlaneseq
    %v90 = vshrl.u32 %v89, 7
    %v91 = vsub.s32 0, %v90
    %v92 = vrot.slane %v67, %v91
    %v93 = vlaneseq
    %v94 = vshrl.u32 %v93, 7
    %v95 = vsub.s32 4, %v94
    %v96 = vrot.slane %v67, %v95
    %v97 = vlaneseq
    %v98 = vshrl.u32 %v97, 7
    %v99 = vsub.s32 0, %v98
    %v100 = vrot.slane %v68, %v99
    %v106 = vlaneseq
    %v107 = vshrl.u32 %v106, 7
    %v108 = vsub.s32 0, %v107
    %v109 = vrot.slane %v84, %v108
    %v110 = vlaneseq
    %v111 = vshrl.u32 %v110, 7
    %v112 = vsub.s32 0, %v111
    %v113 = vrot.slane %v88, %v112
    %v114 = vlaneseq
    %v115 = vshrl.u32 %v114, 7
    %v116 = vsub.s32 0, %v115
    %v117 = vrot.slane %v92, %v116
    %v118 = vlaneseq
    %v119 = vshrl.u32 %v118, 7
    %v120 = vsub.s32 0, %v119
    %v121 = vrot.slane %v96, %v120
    %v122 = vlaneseq
    %v123 = vshrl.u32 %v122, 7
    %v124 = vsub.s32 0, %v123
    %v125 = vrot.slane %v100, %v124
    %v135 = vunpack.c.l.b16 %v69
    %v136 = vunpack.c.h.b16 %v69
    %v137 = vunpack.c.l.b16 %v70
    %v138 = vunpack.c.h.b16 %v70
    %v139 = vunpack.c.l.b16 %v71
    %v140 = vunpack.c.l.b16 %v72
    %v141 = vunpack.c.h.b16 %v72
    %v142 = vunpack.c.l.b16 %v73
    %v143 = vunpack.c.h.b16 %v73
    %v144 = vunpack.c.l.b16 %v74
    %v145 = vunpack.c.l.b16 %v75
    %v146 = vunpack.c.h.b16 %v75
    %v147 = vunpack.c.l.b16 %v76
    %v148 = vunpack.c.h.b16 %v76
    %v149 = vunpack.c.l.b16 %v77
    %v150 = vpack.c.b16 %v140, %v135
    %v151 = vpack.c.b16 %v141, %v136
    %v152 = vpack.c.b16 %v142, %v137
    %v153 = vpack.c.b16 %v143, %v138
    %v154 = vpack.c.b16 %v144, %v139
    %v155 = vpack.c.b16 %v145, %v145
    %v156 = vpack.c.b16 %v146, %v146
    %v157 = vpack.c.b16 %v147, %v147
    %v158 = vpack.c.b16 %v148, %v148
    %v159 = vpack.c.b16 %v149, %v149
    %vm165 = vcmask 146432
    %v167 = vsel %vm165, %v65, 0
    %vm169 = vcmask 1040384
    %v171 = vsel %vm169, %v155, 0
    %v174 = vsel %vm169, %v156, 0
    %v177 = vsel %vm169, %v157, 0
    %v180 = vsel %vm169, %v158, 0
    %v183 = vsel %vm169, %v159, 0
    %185 = vmatprep.subr.bf16.mxu0 0
    %186 = vmatpush1.bf16.msra.mxu0 0
    %187 = vmatprep.subr.bf16.mxu0 0
    %188 = vmatpush1.bf16.msra.mxu0 0
    %189 = vmatprep.subr.bf16.mxu0 0
    %190 = vmatpush1.bf16.msra.mxu0 0
    %191 = vmatprep.subr.bf16.mxu0 0
    %192 = vmatpush1.bf16.msra.mxu0 0
    %193 = vmatprep.subr.bf16.mxu0 0
    %194 = vmatpush1.bf16.msra.mxu0 0
    %195 = vmatprep.subr.bf16.mxu0 0
    %196 = vmatpush1.bf16.msra.mxu0 0
    %197 = vmatprep.subr.bf16.mxu0 %v174
    %198 = vmatpush1.bf16.msra.mxu0 %v171
    %199 = vmatprep.subr.bf16.mxu0 %v151
    %200 = vmatpush1.bf16.msra.mxu0 %v150
    %201 = vmatprep.subr.bf16.mxu0 0
    %202 = vmatpush2.bf16.msra.mxu0 0
    %203 = vmatprep.subr.bf16.mxu0 0
    %204 = vmatpush2.bf16.msra.mxu0 0
    %205 = vmatprep.subr.bf16.mxu0 0
    %206 = vmatpush2.bf16.msra.mxu0 0
    %207 = vmatprep.subr.bf16.mxu0 0
    %208 = vmatpush2.bf16.msra.mxu0 0
    %209 = vmatprep.subr.bf16.mxu0 0
    %210 = vmatpush2.bf16.msra.mxu0 0
    %211 = vmatprep.subr.bf16.mxu0 0
    %212 = vmatpush2.bf16.msra.mxu0 0
    %213 = vmatprep.subr.bf16.mxu0 0
    %214 = vmatpush2.bf16.msra.mxu0 0
    %215 = vmatprep.subr.bf16.mxu0 0
    %216 = vmatpush2.bf16.msra.mxu0 0
    %217 = vmatprep.mubr.bf16.mxu0 0
    %218 = vmatmul.mubr.bf16.gmra.mxu0 %v167
    %v219 = vpop.f32.mrf.mxu0
    %v220 = vadd.f32 %v109, %v219
    %v221 = vpop.f32.mrf.mxu0
    %v222 = vadd.f32 %v113, %v221
    %v223 = vpop.f32.mrf.mxu0
    %v224 = vpop.f32.mrf.mxu0
    %225 = vdwg.mxu0
    %226 = vmatprep.subr.bf16.mxu0 0
    %227 = vmatpush1.bf16.msra.mxu0 0
    %228 = vmatprep.subr.bf16.mxu0 0
    %229 = vmatpush1.bf16.msra.mxu0 0
    %230 = vmatprep.subr.bf16.mxu0 0
    %231 = vmatpush1.bf16.msra.mxu0 0
    %232 = vmatprep.subr.bf16.mxu0 0
    %233 = vmatpush1.bf16.msra.mxu0 0
    %234 = vmatprep.subr.bf16.mxu0 0
    %235 = vmatpush1.bf16.msra.mxu0 0
    %236 = vmatprep.subr.bf16.mxu0 0
    %237 = vmatpush1.bf16.msra.mxu0 0
    %238 = vmatprep.subr.bf16.mxu0 %v180
    %239 = vmatpush1.bf16.msra.mxu0 %v177
    %240 = vmatprep.subr.bf16.mxu0 %v153
    %241 = vmatpush1.bf16.msra.mxu0 %v152
    %242 = vmatprep.subr.bf16.mxu0 0
    %243 = vmatpush2.bf16.msra.mxu0 0
    %244 = vmatprep.subr.bf16.mxu0 0
    %245 = vmatpush2.bf16.msra.mxu0 0
    %246 = vmatprep.subr.bf16.mxu0 0
    %247 = vmatpush2.bf16.msra.mxu0 0
    %248 = vmatprep.subr.bf16.mxu0 0
    %249 = vmatpush2.bf16.msra.mxu0 0
    %250 = vmatprep.subr.bf16.mxu0 0
    %251 = vmatpush2.bf16.msra.mxu0 0
    %252 = vmatprep.subr.bf16.mxu0 0
    %253 = vmatpush2.bf16.msra.mxu0 0
    %254 = vmatprep.subr.bf16.mxu0 0
    %255 = vmatpush2.bf16.msra.mxu0 0
    %256 = vmatprep.subr.bf16.mxu0 0
    %257 = vmatpush2.bf16.msra.mxu0 0
    %258 = vmatprep.mubr.bf16.mxu0 0
    %259 = vmatmul.mubr.bf16.gmra.mxu0 %v167
    %v260 = vpop.f32.mrf.mxu0
    %v261 = vadd.f32 %v117, %v260
    %v262 = vpop.f32.mrf.mxu0
    %v263 = vadd.f32 %v121, %v262
    %v264 = vpop.f32.mrf.mxu0
    %v265 = vpop.f32.mrf.mxu0
    %266 = vdwg.mxu0
    %267 = vmatprep.subr.bf16.mxu0 0
    %268 = vmatpush1.bf16.msra.mxu0 0
    %269 = vmatprep.subr.bf16.mxu0 0
    %270 = vmatpush1.bf16.msra.mxu0 0
    %271 = vmatprep.subr.bf16.mxu0 0
    %272 = vmatpush1.bf16.msra.mxu0 0
    %273 = vmatprep.subr.bf16.mxu0 0
    %274 = vmatpush1.bf16.msra.mxu0 0
    %275 = vmatprep.subr.bf16.mxu0 0
    %276 = vmatpush1.bf16.msra.mxu0 0
    %277 = vmatprep.subr.bf16.mxu0 0
    %278 = vmatpush1.bf16.msra.mxu0 0
    %279 = vmatprep.subr.bf16.mxu0 0
    %280 = vmatpush1.bf16.msra.mxu0 %v183
    %281 = vmatprep.subr.bf16.mxu0 0
    %282 = vmatpush1.bf16.msra.mxu0 %v154
    %283 = vmatprep.subr.bf16.mxu0 0
    %284 = vmatpush2.bf16.msra.mxu0 0
    %285 = vmatprep.subr.bf16.mxu0 0
    %286 = vmatpush2.bf16.msra.mxu0 0
    %287 = vmatprep.subr.bf16.mxu0 0
    %288 = vmatpush2.bf16.msra.mxu0 0
    %289 = vmatprep.subr.bf16.mxu0 0
    %290 = vmatpush2.bf16.msra.mxu0 0
    %291 = vmatprep.subr.bf16.mxu0 0
    %292 = vmatpush2.bf16.msra.mxu0 0
    %293 = vmatprep.subr.bf16.mxu0 0
    %294 = vmatpush2.bf16.msra.mxu0 0
    %295 = vmatprep.subr.bf16.mxu0 0
    %296 = vmatpush2.bf16.msra.mxu0 0
    %297 = vmatprep.subr.bf16.mxu0 0
    %298 = vmatpush2.bf16.msra.mxu0 0
    %299 = vmatprep.mubr.bf16.mxu0 0
    %300 = vmatmul.mubr.bf16.gmra.mxu0 %v167
    %v301 = vpop.f32.mrf.mxu0
    %v302 = vadd.f32 %v125, %v301
    %v303 = vpop.f32.mrf.mxu0
    %v304 = vpop.f32.mrf.mxu0
    %v305 = vpop.f32.mrf.mxu0
    %306 = vdwg.mxu0
    %v307 = vtanh.pop %v220
    %v308 = vtanh.pop %v222
    %v309 = vtanh.pop %v261
    %v310 = vtanh.pop %v263
    %v311 = vtanh.pop %v302
    %v312 = vpack.c.bf16 %v307, %v307
    %v313 = vpack.c.bf16 %v308, %v308
    %v314 = vpack.c.bf16 %v309, %v309
    %v315 = vpack.c.bf16 %v310, %v310
    %v316 = vpack.c.bf16 %v311, %v311
    %v317 = vld [vmem:[#allocation5] sm:$0xff]
    %v318 = vld [vmem:[#allocation5 + $0x8] sm:$0xff]
    %v319 = vld [vmem:[#allocation5 + $0x10] sm:$0xff]
    %v320 = vld [vmem:[#allocation5 + $0x18] sm:$0xff]
    %v321 = vld [vmem:[#allocation5 + $0x20] sm:$0xff]
    %v322 = vld [vmem:[#allocation5 + $0x28] sm:$0xff]
    %v323 = vld [vmem:[#allocation5 + $0x30] sm:$0xff]
    %v324 = vld [vmem:[#allocation5 + $0x38] sm:$0xff]
    %v325 = vld [vmem:[#allocation5 + $0x40] sm:$0xff]
    %v326 = vld [vmem:[#allocation5 + $0x48] sm:$0xff]
    %v327 = vld [vmem:[#allocation5 + $0x50] sm:$0xff]
    %v328 = vld [vmem:[#allocation5 + $0x58] sm:$0xff]
    %v329 = vld [vmem:[#allocation5 + $0x60] sm:$0xff]
    %v330 = vld [vmem:[#allocation5 + $0x68] sm:$0xff]
    %v331 = vld [vmem:[#allocation5 + $0x70] sm:$0xff]
    %v332 = vld [vmem:[#allocation5 + $0x78] sm:$0xff]
    %v333 = vld [vmem:[#allocation5 + $0x80] sm:$0xff]
    %v334 = vld [vmem:[#allocation5 + $0x88] sm:$0xff]
    %v335 = vld [vmem:[#allocation5 + $0x90] sm:$0xff]
    %v336 = vld [vmem:[#allocation5 + $0x98] sm:$0xff]
    %v337 = vld [vmem:[#allocation5 + $0xa0] sm:$0xff]
    %v338 = vld [vmem:[#allocation5 + $0xa8] sm:$0xff]
    %v339 = vld [vmem:[#allocation5 + $0xb0] sm:$0xff]
    %v340 = vld [vmem:[#allocation5 + $0xb8] sm:$0xff]
    %v341 = vld [vmem:[#allocation5 + $0xc0] sm:$0xff]
    %v342 = vld [vmem:[#allocation5 + $0xc8] sm:$0xff]
    %v343 = vld [vmem:[#allocation5 + $0xd0] sm:$0xff]
    %v344 = vld [vmem:[#allocation5 + $0xd8] sm:$0xff]
    %v345 = vld [vmem:[#allocation5 + $0xe0] sm:$0xff]
    %v346 = vld [vmem:[#allocation5 + $0xe8] sm:$0xff]
    %v347 = vld [vmem:[#allocation5 + $0xf0] sm:$0xff]
    %v348 = vld [vmem:[#allocation5 + $0xf8] sm:$0xff]
    %v349 = vld [vmem:[#allocation5 + $0x100] sm:$0xff]
    %v350 = vld [vmem:[#allocation5 + $0x108] sm:$0xff]
    %v351 = vld [vmem:[#allocation5 + $0x110] sm:$0xff]
    %v352 = vld [vmem:[#allocation5 + $0x118] sm:$0xff]
    %v353 = vld [vmem:[#allocation5 + $0x120] sm:$0xff]
    %v354 = vld [vmem:[#allocation5 + $0x128] sm:$0xff]
    %v355 = vld [vmem:[#allocation5 + $0x130] sm:$0xff]
    %v356 = vld [vmem:[#allocation5 + $0x138] sm:$0xff]
    %v357 = vld [vmem:[#allocation5 + $0x140] sm:$0xff]
    %v358 = vld [vmem:[#allocation5 + $0x148] sm:$0xff]
    %v359 = vld [vmem:[#allocation5 + $0x150] sm:$0xff]
    %v360 = vld [vmem:[#allocation5 + $0x158] sm:$0xff]
    %v361 = vld [vmem:[#allocation5 + $0x160] sm:$0xff]
    %v362 = vld [vmem:[#allocation5 + $0x168] sm:$0xff]
    %v363 = vld [vmem:[#allocation5 + $0x170] sm:$0xff]
    %v364 = vld [vmem:[#allocation5 + $0x178] sm:$0xff]
    %v365 = vld [vmem:[#allocation5 + $0x180] sm:$0xff]
    %v366 = vld [vmem:[#allocation5 + $0x188] sm:$0xff]
    %v367 = vld [vmem:[#allocation5 + $0x190] sm:$0xff]
    %v368 = vld [vmem:[#allocation5 + $0x198] sm:$0xff]
    %v369 = vld [vmem:[#allocation5 + $0x1a0] sm:$0xff]
    %v370 = vld [vmem:[#allocation5 + $0x1a8] sm:$0xff]
    %v371 = vld [vmem:[#allocation5 + $0x1b0] sm:$0xff]
    %v372 = vld [vmem:[#allocation5 + $0x1b8] sm:$0xff]
    %v373 = vld [vmem:[#allocation5 + $0x1c0] sm:$0xff]
    %v374 = vld [vmem:[#allocation5 + $0x1c8] sm:$0xff]
    %v375 = vld [vmem:[#allocation5 + $0x1d0] sm:$0xff]
    %v376 = vld [vmem:[#allocation5 + $0x1d8] sm:$0xff]
    %v377 = vld [vmem:[#allocation5 + $0x1e0] sm:$0xff]
    %v378 = vld [vmem:[#allocation5 + $0x1e8] sm:$0xff]
    %v379 = vld [vmem:[#allocation5 + $0x1f0] sm:$0xff]
    %v380 = vld [vmem:[#allocation5 + $0x1f8] sm:$0xff]
    %v381 = vld [vmem:[#allocation5 + $0x200] sm:$0xff]
    %v382 = vld [vmem:[#allocation5 + $0x208] sm:$0xff]
    %v383 = vld [vmem:[#allocation5 + $0x210] sm:$0xff]
    %v384 = vld [vmem:[#allocation5 + $0x218] sm:$0x33]
    %v385 = vlaneseq
    %v386 = vshrl.u32 %v385, 7
    %v387 = vsub.s32 1, %v386
    %v388 = vrot.slane %v66, %v387
    %v389 = vlaneseq
    %v390 = vshrl.u32 %v389, 7
    %v391 = vsub.s32 5, %v390
    %v392 = vrot.slane %v66, %v391
    %v395 = vlaneseq
    %v396 = vshrl.u32 %v395, 7
    %v397 = vsub.s32 1, %v396
    %v398 = vrot.slane %v388, %v397
    %v399 = vlaneseq
    %v400 = vshrl.u32 %v399, 7
    %v401 = vsub.s32 1, %v400
    %v402 = vrot.slane %v392, %v401
    %v471 = vunpack.c.l.b16 %v317
    %v472 = vunpack.c.h.b16 %v317
    %v473 = vunpack.c.l.b16 %v318
    %v474 = vunpack.c.h.b16 %v318
    %v475 = vunpack.c.l.b16 %v319
    %v476 = vunpack.c.h.b16 %v319
    %v477 = vunpack.c.l.b16 %v320
    %v478 = vunpack.c.h.b16 %v320
    %v479 = vunpack.c.l.b16 %v321
    %v480 = vunpack.c.h.b16 %v321
    %v481 = vunpack.c.l.b16 %v322
    %v482 = vunpack.c.h.b16 %v322
    %v483 = vunpack.c.l.b16 %v323
    %v484 = vunpack.c.h.b16 %v323
    %v485 = vunpack.c.l.b16 %v324
    %v486 = vunpack.c.h.b16 %v324
    %v487 = vunpack.c.l.b16 %v325
    %v488 = vunpack.c.h.b16 %v325
    %v489 = vunpack.c.l.b16 %v326
    %v490 = vunpack.c.h.b16 %v326
    %v491 = vunpack.c.l.b16 %v327
    %v492 = vunpack.c.h.b16 %v327
    %v493 = vunpack.c.l.b16 %v328
    %v494 = vunpack.c.h.b16 %v328
    %v495 = vunpack.c.l.b16 %v329
    %v496 = vunpack.c.h.b16 %v329
    %v497 = vunpack.c.l.b16 %v330
    %v498 = vunpack.c.h.b16 %v330
    %v499 = vunpack.c.l.b16 %v331
    %v500 = vunpack.c.h.b16 %v331
    %v501 = vunpack.c.l.b16 %v332
    %v502 = vunpack.c.h.b16 %v332
    %v503 = vunpack.c.l.b16 %v333
    %v504 = vunpack.c.h.b16 %v333
    %v505 = vunpack.c.l.b16 %v334
    %v506 = vunpack.c.h.b16 %v334
    %v507 = vunpack.c.l.b16 %v335
    %v508 = vunpack.c.h.b16 %v335
    %v509 = vunpack.c.l.b16 %v336
    %v510 = vunpack.c.h.b16 %v336
    %v511 = vunpack.c.l.b16 %v337
    %v512 = vunpack.c.h.b16 %v337
    %v513 = vunpack.c.l.b16 %v338
    %v514 = vunpack.c.h.b16 %v338
    %v515 = vunpack.c.l.b16 %v339
    %v516 = vunpack.c.h.b16 %v339
    %v517 = vunpack.c.l.b16 %v340
    %v518 = vunpack.c.h.b16 %v340
    %v519 = vunpack.c.l.b16 %v341
    %v520 = vunpack.c.h.b16 %v341
    %v521 = vunpack.c.l.b16 %v342
    %v522 = vunpack.c.h.b16 %v342
    %v523 = vunpack.c.l.b16 %v343
    %v524 = vunpack.c.h.b16 %v343
    %v525 = vunpack.c.l.b16 %v344
    %v526 = vunpack.c.h.b16 %v344
    %v527 = vunpack.c.l.b16 %v345
    %v528 = vunpack.c.h.b16 %v345
    %v529 = vunpack.c.l.b16 %v346
    %v530 = vunpack.c.h.b16 %v346
    %v531 = vunpack.c.l.b16 %v347
    %v532 = vunpack.c.h.b16 %v347
    %v533 = vunpack.c.l.b16 %v348
    %v534 = vunpack.c.h.b16 %v348
    %v535 = vunpack.c.l.b16 %v349
    %v536 = vunpack.c.h.b16 %v349
    %v537 = vunpack.c.l.b16 %v350
    %v538 = vunpack.c.h.b16 %v350
    %v539 = vunpack.c.l.b16 %v351
    %v540 = vunpack.c.h.b16 %v351
    %v541 = vunpack.c.l.b16 %v352
    %v542 = vunpack.c.h.b16 %v352
    %v543 = vunpack.c.l.b16 %v353
    %v544 = vunpack.c.h.b16 %v353
    %v545 = vunpack.c.l.b16 %v354
    %v546 = vunpack.c.h.b16 %v354
    %v547 = vunpack.c.l.b16 %v355
    %v548 = vunpack.c.h.b16 %v355
    %v549 = vunpack.c.l.b16 %v356
    %v550 = vunpack.c.h.b16 %v356
    %v551 = vunpack.c.l.b16 %v357
    %v552 = vunpack.c.h.b16 %v357
    %v553 = vunpack.c.l.b16 %v358
    %v554 = vunpack.c.h.b16 %v358
    %v555 = vunpack.c.l.b16 %v359
    %v556 = vunpack.c.h.b16 %v359
    %v557 = vunpack.c.l.b16 %v360
    %v558 = vunpack.c.h.b16 %v360
    %v559 = vunpack.c.l.b16 %v361
    %v560 = vunpack.c.h.b16 %v361
    %v561 = vunpack.c.l.b16 %v362
    %v562 = vunpack.c.h.b16 %v362
    %v563 = vunpack.c.l.b16 %v363
    %v564 = vunpack.c.h.b16 %v363
    %v565 = vunpack.c.l.b16 %v364
    %v566 = vunpack.c.h.b16 %v364
    %v567 = vunpack.c.l.b16 %v365
    %v568 = vunpack.c.h.b16 %v365
    %v569 = vunpack.c.l.b16 %v366
    %v570 = vunpack.c.h.b16 %v366
    %v571 = vunpack.c.l.b16 %v367
    %v572 = vunpack.c.h.b16 %v367
    %v573 = vunpack.c.l.b16 %v368
    %v574 = vunpack.c.h.b16 %v368
    %v575 = vunpack.c.l.b16 %v369
    %v576 = vunpack.c.h.b16 %v369
    %v577 = vunpack.c.l.b16 %v370
    %v578 = vunpack.c.h.b16 %v370
    %v579 = vunpack.c.l.b16 %v371
    %v580 = vunpack.c.h.b16 %v371
    %v581 = vunpack.c.l.b16 %v372
    %v582 = vunpack.c.h.b16 %v372
    %v583 = vunpack.c.l.b16 %v373
    %v584 = vunpack.c.h.b16 %v373
    %v585 = vunpack.c.l.b16 %v374
    %v586 = vunpack.c.h.b16 %v374
    %v587 = vunpack.c.l.b16 %v375
    %v588 = vunpack.c.h.b16 %v375
    %v589 = vunpack.c.l.b16 %v376
    %v590 = vunpack.c.h.b16 %v376
    %v591 = vunpack.c.l.b16 %v377
    %v592 = vunpack.c.h.b16 %v377
    %v593 = vunpack.c.l.b16 %v378
    %v594 = vunpack.c.h.b16 %v378
    %v595 = vunpack.c.l.b16 %v379
    %v596 = vunpack.c.h.b16 %v379
    %v597 = vunpack.c.l.b16 %v380
    %v598 = vunpack.c.h.b16 %v380
    %v599 = vunpack.c.l.b16 %v381
    %v600 = vunpack.c.h.b16 %v381
    %v601 = vunpack.c.l.b16 %v382
    %v602 = vunpack.c.h.b16 %v382
    %v603 = vunpack.c.l.b16 %v383
    %v604 = vunpack.c.h.b16 %v383
    %v605 = vunpack.c.l.b16 %v384
    %v606 = vunpack.c.h.b16 %v384
    %v607 = vpack.c.b16 %v473, %v471
    %v608 = vpack.c.b16 %v474, %v472
    %v609 = vpack.c.b16 %v477, %v475
    %v610 = vpack.c.b16 %v478, %v476
    %v611 = vpack.c.b16 %v481, %v479
    %v612 = vpack.c.b16 %v482, %v480
    %v613 = vpack.c.b16 %v485, %v483
    %v614 = vpack.c.b16 %v486, %v484
    %v615 = vpack.c.b16 %v489, %v487
    %v616 = vpack.c.b16 %v490, %v488
    %v617 = vpack.c.b16 %v493, %v491
    %v618 = vpack.c.b16 %v494, %v492
    %v619 = vpack.c.b16 %v497, %v495
    %v620 = vpack.c.b16 %v498, %v496
    %v621 = vpack.c.b16 %v501, %v499
    %v622 = vpack.c.b16 %v502, %v500
    %v623 = vpack.c.b16 %v505, %v503
    %v624 = vpack.c.b16 %v506, %v504
    %v625 = vpack.c.b16 %v509, %v507
    %v626 = vpack.c.b16 %v510, %v508
    %v627 = vpack.c.b16 %v513, %v511
    %v628 = vpack.c.b16 %v514, %v512
    %v629 = vpack.c.b16 %v517, %v515
    %v630 = vpack.c.b16 %v518, %v516
    %v631 = vpack.c.b16 %v521, %v519
    %v632 = vpack.c.b16 %v522, %v520
    %v633 = vpack.c.b16 %v525, %v523
    %v634 = vpack.c.b16 %v526, %v524
    %v635 = vpack.c.b16 %v529, %v527
    %v636 = vpack.c.b16 %v530, %v528
    %v637 = vpack.c.b16 %v533, %v531
    %v638 = vpack.c.b16 %v534, %v532
    %v639 = vpack.c.b16 %v537, %v535
    %v640 = vpack.c.b16 %v538, %v536
    %v641 = vpack.c.b16 %v541, %v539
    %v642 = vpack.c.b16 %v542, %v540
    %v643 = vpack.c.b16 %v545, %v543
    %v644 = vpack.c.b16 %v546, %v544
    %v645 = vpack.c.b16 %v549, %v547
    %v646 = vpack.c.b16 %v550, %v548
    %v647 = vpack.c.b16 %v553, %v551
    %v648 = vpack.c.b16 %v554, %v552
    %v649 = vpack.c.b16 %v557, %v555
    %v650 = vpack.c.b16 %v558, %v556
    %v651 = vpack.c.b16 %v561, %v559
    %v652 = vpack.c.b16 %v562, %v560
    %v653 = vpack.c.b16 %v565, %v563
    %v654 = vpack.c.b16 %v566, %v564
    %v655 = vpack.c.b16 %v569, %v567
    %v656 = vpack.c.b16 %v570, %v568
    %v657 = vpack.c.b16 %v573, %v571
    %v658 = vpack.c.b16 %v574, %v572
    %v659 = vpack.c.b16 %v577, %v575
    %v660 = vpack.c.b16 %v578, %v576
    %v661 = vpack.c.b16 %v581, %v579
    %v662 = vpack.c.b16 %v582, %v580
    %v663 = vpack.c.b16 %v585, %v583
    %v664 = vpack.c.b16 %v586, %v584
    %v665 = vpack.c.b16 %v589, %v587
    %v666 = vpack.c.b16 %v590, %v588
    %v667 = vpack.c.b16 %v593, %v591
    %v668 = vpack.c.b16 %v594, %v592
    %v669 = vpack.c.b16 %v597, %v595
    %v670 = vpack.c.b16 %v598, %v596
    %v671 = vpack.c.b16 %v601, %v599
    %v672 = vpack.c.b16 %v602, %v600
    %v673 = vpack.c.b16 %v605, %v603
    %v674 = vpack.c.b16 %v606, %v604
    %vm741 = vcmask 228352
    %v743 = vsel %vm741, %v316, 0
    %vm745 = vcmask 1045504
    %v747 = vsel %vm745, %v673, 0
    %v750 = vsel %vm745, %v674, 0
    %752 = vmatprep.subr.bf16.mxu0 %v622
    %753 = vmatpush1.bf16.msra.mxu0 %v621
    %754 = vmatprep.subr.bf16.mxu0 %v620
    %755 = vmatpush1.bf16.msra.mxu0 %v619
    %756 = vmatprep.subr.bf16.mxu0 %v618
    %757 = vmatpush1.bf16.msra.mxu0 %v617
    %758 = vmatprep.subr.bf16.mxu0 %v616
    %759 = vmatpush1.bf16.msra.mxu0 %v615
    %760 = vmatprep.subr.bf16.mxu0 %v614
    %761 = vmatpush1.bf16.msra.mxu0 %v613
    %762 = vmatprep.subr.bf16.mxu0 %v612
    %763 = vmatpush1.bf16.msra.mxu0 %v611
    %764 = vmatprep.subr.bf16.mxu0 %v610
    %765 = vmatpush1.bf16.msra.mxu0 %v609
    %766 = vmatprep.subr.bf16.mxu0 %v608
    %767 = vmatpush1.bf16.msra.mxu0 %v607
    %768 = vmatprep.subr.bf16.mxu0 %v638
    %769 = vmatpush2.bf16.msra.mxu0 %v637
    %770 = vmatprep.subr.bf16.mxu0 %v636
    %771 = vmatpush2.bf16.msra.mxu0 %v635
    %772 = vmatprep.subr.bf16.mxu0 %v634
    %773 = vmatpush2.bf16.msra.mxu0 %v633
    %774 = vmatprep.subr.bf16.mxu0 %v632
    %775 = vmatpush2.bf16.msra.mxu0 %v631
    %776 = vmatprep.subr.bf16.mxu0 %v630
    %777 = vmatpush2.bf16.msra.mxu0 %v629
    %778 = vmatprep.subr.bf16.mxu0 %v628
    %779 = vmatpush2.bf16.msra.mxu0 %v627
    %780 = vmatprep.subr.bf16.mxu0 %v626
    %781 = vmatpush2.bf16.msra.mxu0 %v625
    %782 = vmatprep.subr.bf16.mxu0 %v624
    %783 = vmatpush2.bf16.msra.mxu0 %v623
    %784 = vmatprep.mubr.bf16.mxu0 %v313
    %785 = vmatmul.mubr.bf16.gmra.mxu0 %v312
    %v786 = vpop.f32.mrf.mxu0
    %v787 = vadd.f32 %v398, %v786
    %v788 = vpop.f32.mrf.mxu0
    %v789 = vadd.f32 %v402, %v788
    %v790 = vpop.f32.mrf.mxu0
    %v791 = vpop.f32.mrf.mxu0
    %792 = vdwg.mxu0
    %793 = vmatprep.subr.bf16.mxu0 %v654
    %794 = vmatpush1.bf16.msra.mxu0 %v653
    %795 = vmatprep.subr.bf16.mxu0 %v652
    %796 = vmatpush1.bf16.msra.mxu0 %v651
    %797 = vmatprep.subr.bf16.mxu0 %v650
    %798 = vmatpush1.bf16.msra.mxu0 %v649
    %799 = vmatprep.subr.bf16.mxu0 %v648
    %800 = vmatpush1.bf16.msra.mxu0 %v647
    %801 = vmatprep.subr.bf16.mxu0 %v646
    %802 = vmatpush1.bf16.msra.mxu0 %v645
    %803 = vmatprep.subr.bf16.mxu0 %v644
    %804 = vmatpush1.bf16.msra.mxu0 %v643
    %805 = vmatprep.subr.bf16.mxu0 %v642
    %806 = vmatpush1.bf16.msra.mxu0 %v641
    %807 = vmatprep.subr.bf16.mxu0 %v640
    %808 = vmatpush1.bf16.msra.mxu0 %v639
    %809 = vmatprep.subr.bf16.mxu0 %v670
    %810 = vmatpush2.bf16.msra.mxu0 %v669
    %811 = vmatprep.subr.bf16.mxu0 %v668
    %812 = vmatpush2.bf16.msra.mxu0 %v667
    %813 = vmatprep.subr.bf16.mxu0 %v666
    %814 = vmatpush2.bf16.msra.mxu0 %v665
    %815 = vmatprep.subr.bf16.mxu0 %v664
    %816 = vmatpush2.bf16.msra.mxu0 %v663
    %817 = vmatprep.subr.bf16.mxu0 %v662
    %818 = vmatpush2.bf16.msra.mxu0 %v661
    %819 = vmatprep.subr.bf16.mxu0 %v660
    %820 = vmatpush2.bf16.msra.mxu0 %v659
    %821 = vmatprep.subr.bf16.mxu0 %v658
    %822 = vmatpush2.bf16.msra.mxu0 %v657
    %823 = vmatprep.subr.bf16.mxu0 %v656
    %824 = vmatpush2.bf16.msra.mxu0 %v655
    %825 = vmatprep.mubr.bf16.mxu0 %v315
    %826 = vmatmul.mubr.bf16.gmra.mxu0 %v314
    %v827 = vpop.f32.mrf.mxu0
    %v828 = vadd.f32 %v787, %v827
    %v829 = vpop.f32.mrf.mxu0
    %v830 = vadd.f32 %v789, %v829
    %v831 = vpop.f32.mrf.mxu0
    %v832 = vpop.f32.mrf.mxu0
    %833 = vdwg.mxu0
    %834 = vmatprep.subr.bf16.mxu0 0
    %835 = vmatpush1.bf16.msra.mxu0 0
    %836 = vmatprep.subr.bf16.mxu0 0
    %837 = vmatpush1.bf16.msra.mxu0 0
    %838 = vmatprep.subr.bf16.mxu0 0
    %839 = vmatpush1.bf16.msra.mxu0 0
    %840 = vmatprep.subr.bf16.mxu0 0
    %841 = vmatpush1.bf16.msra.mxu0 0
    %842 = vmatprep.subr.bf16.mxu0 0
    %843 = vmatpush1.bf16.msra.mxu0 0
    %844 = vmatprep.subr.bf16.mxu0 0
    %845 = vmatpush1.bf16.msra.mxu0 0
    %846 = vmatprep.subr.bf16.mxu0 %v750
    %847 = vmatpush1.bf16.msra.mxu0 %v747
    %848 = vmatprep.subr.bf16.mxu0 %v672
    %849 = vmatpush1.bf16.msra.mxu0 %v671
    %850 = vmatprep.subr.bf16.mxu0 0
    %851 = vmatpush2.bf16.msra.mxu0 0
    %852 = vmatprep.subr.bf16.mxu0 0
    %853 = vmatpush2.bf16.msra.mxu0 0
    %854 = vmatprep.subr.bf16.mxu0 0
    %855 = vmatpush2.bf16.msra.mxu0 0
    %856 = vmatprep.subr.bf16.mxu0 0
    %857 = vmatpush2.bf16.msra.mxu0 0
    %858 = vmatprep.subr.bf16.mxu0 0
    %859 = vmatpush2.bf16.msra.mxu0 0
    %860 = vmatprep.subr.bf16.mxu0 0
    %861 = vmatpush2.bf16.msra.mxu0 0
    %862 = vmatprep.subr.bf16.mxu0 0
    %863 = vmatpush2.bf16.msra.mxu0 0
    %864 = vmatprep.subr.bf16.mxu0 0
    %865 = vmatpush2.bf16.msra.mxu0 0
    %866 = vmatprep.mubr.bf16.mxu0 0
    %867 = vmatmul.mubr.bf16.gmra.mxu0 %v743
    %v868 = vpop.f32.mrf.mxu0
    %v869 = vadd.f32 %v828, %v868
    %v870 = vpop.f32.mrf.mxu0
    %v871 = vadd.f32 %v830, %v870
    %v872 = vpop.f32.mrf.mxu0
    %v873 = vpop.f32.mrf.mxu0
    %874 = vdwg.mxu0
    %v875 = vtanh.pop %v869
    %v876 = vtanh.pop %v871
    %v877 = vpack.c.bf16 %v875, %v875
    %v878 = vpack.c.bf16 %v876, %v876
    %v879 = vld [vmem:[#allocation7] sm:$0xf]
    %v880 = vld [vmem:[#allocation7 + $0x4] sm:$0xf]
    %v881 = vld [vmem:[#allocation7 + $0x8] sm:$0xf]
    %v882 = vld [vmem:[#allocation7 + $0xc] sm:$0xf]
    %v883 = vld [vmem:[#allocation7 + $0x10] sm:$0xf]
    %v884 = vld [vmem:[#allocation7 + $0x14] sm:$0xf]
    %v885 = vld [vmem:[#allocation7 + $0x18] sm:$0xf]
    %v886 = vld [vmem:[#allocation7 + $0x1c] sm:$0xf]
    %v887 = vld [vmem:[#allocation7 + $0x20] sm:$0xf]
    %v888 = vld [vmem:[#allocation7 + $0x24] sm:$0xf]
    %v889 = vld [vmem:[#allocation7 + $0x28] sm:$0xf]
    %v890 = vld [vmem:[#allocation7 + $0x2c] sm:$0xf]
    %v891 = vld [vmem:[#allocation7 + $0x30] sm:$0xf]
    %v892 = vld [vmem:[#allocation7 + $0x34] sm:$0xf]
    %v893 = vld [vmem:[#allocation7 + $0x38] sm:$0xf]
    %v894 = vld [vmem:[#allocation7 + $0x3c] sm:$0xf]
    %v895 = vld [vmem:[#allocation7 + $0x40] sm:$0xf]
    %v896 = vld [vmem:[#allocation7 + $0x44] sm:$0xf]
    %v897 = vld [vmem:[#allocation7 + $0x48] sm:$0xf]
    %v898 = vld [vmem:[#allocation7 + $0x4c] sm:$0xf]
    %v899 = vld [vmem:[#allocation7 + $0x50] sm:$0xf]
    %v900 = vld [vmem:[#allocation7 + $0x54] sm:$0xf]
    %v901 = vld [vmem:[#allocation7 + $0x58] sm:$0xf]
    %v902 = vld [vmem:[#allocation7 + $0x5c] sm:$0xf]
    %v903 = vld [vmem:[#allocation7 + $0x60] sm:$0xf]
    %v904 = vld [vmem:[#allocation7 + $0x64] sm:$0xf]
    %v905 = vld [vmem:[#allocation7 + $0x68] sm:$0xf]
    %v906 = vld [vmem:[#allocation7 + $0x6c] sm:$0xf]
    %v907 = vld [vmem:[#allocation7 + $0x70] sm:$0xf]
    %v908 = vld [vmem:[#allocation7 + $0x74] sm:$0x3]
    %v909 = vlaneseq
    %v910 = vshrl.u32 %v909, 7
    %v911 = vsub.s32 2, %v910
    %v912 = vrot.slane %v66, %v911
    %v943 = vunpack.c.l.b16 %v879
    %v944 = vunpack.c.l.b16 %v880
    %v945 = vunpack.c.l.b16 %v881
    %v946 = vunpack.c.l.b16 %v882
    %v947 = vunpack.c.l.b16 %v883
    %v948 = vunpack.c.l.b16 %v884
    %v949 = vunpack.c.l.b16 %v885
    %v950 = vunpack.c.l.b16 %v886
    %v951 = vunpack.c.l.b16 %v887
    %v952 = vunpack.c.l.b16 %v888
    %v953 = vunpack.c.l.b16 %v889
    %v954 = vunpack.c.l.b16 %v890
    %v955 = vunpack.c.l.b16 %v891
    %v956 = vunpack.c.l.b16 %v892
    %v957 = vunpack.c.l.b16 %v893
    %v958 = vunpack.c.l.b16 %v894
    %v959 = vunpack.c.l.b16 %v895
    %v960 = vunpack.c.l.b16 %v896
    %v961 = vunpack.c.l.b16 %v897
    %v962 = vunpack.c.l.b16 %v898
    %v963 = vunpack.c.l.b16 %v899
    %v964 = vunpack.c.l.b16 %v900
    %v965 = vunpack.c.l.b16 %v901
    %v966 = vunpack.c.l.b16 %v902
    %v967 = vunpack.c.l.b16 %v903
    %v968 = vunpack.c.l.b16 %v904
    %v969 = vunpack.c.l.b16 %v905
    %v970 = vunpack.c.l.b16 %v906
    %v971 = vunpack.c.l.b16 %v907
    %v972 = vunpack.c.l.b16 %v908
    %v973 = vpack.c.b16 %v944, %v943
    %v974 = vpack.c.b16 %v946, %v945
    %v975 = vpack.c.b16 %v948, %v947
    %v976 = vpack.c.b16 %v950, %v949
    %v977 = vpack.c.b16 %v952, %v951
    %v978 = vpack.c.b16 %v954, %v953
    %v979 = vpack.c.b16 %v956, %v955
    %v980 = vpack.c.b16 %v958, %v957
    %v981 = vpack.c.b16 %v960, %v959
    %v982 = vpack.c.b16 %v962, %v961
    %v983 = vpack.c.b16 %v964, %v963
    %v984 = vpack.c.b16 %v966, %v965
    %v985 = vpack.c.b16 %v968, %v967
    %v986 = vpack.c.b16 %v970, %v969
    %v987 = vpack.c.b16 %v972, %v971
    %vm1002 = vcmask 883712
    %v1004 = vsel %vm1002, %v878, 0
    %v1007 = vsel %vm745, %v987, 0
    %1009 = vmatprep.subr.bf16.mxu0 0
    %1010 = vmatpush1.bf16.msra.mxu0 %v980
    %1011 = vmatprep.subr.bf16.mxu0 0
    %1012 = vmatpush1.bf16.msra.mxu0 %v979
    %1013 = vmatprep.subr.bf16.mxu0 0
    %1014 = vmatpush1.bf16.msra.mxu0 %v978
    %1015 = vmatprep.subr.bf16.mxu0 0
    %1016 = vmatpush1.bf16.msra.mxu0 %v977
    %1017 = vmatprep.subr.bf16.mxu0 0
    %1018 = vmatpush1.bf16.msra.mxu0 %v976
    %1019 = vmatprep.subr.bf16.mxu0 0
    %1020 = vmatpush1.bf16.msra.mxu0 %v975
    %1021 = vmatprep.subr.bf16.mxu0 0
    %1022 = vmatpush1.bf16.msra.mxu0 %v974
    %1023 = vmatprep.subr.bf16.mxu0 0
    %1024 = vmatpush1.bf16.msra.mxu0 %v973
    %1025 = vmatprep.subr.bf16.mxu0 0
    %1026 = vmatpush2.bf16.msra.mxu0 0
    %1027 = vmatprep.subr.bf16.mxu0 0
    %1028 = vmatpush2.bf16.msra.mxu0 %v1007
    %1029 = vmatprep.subr.bf16.mxu0 0
    %1030 = vmatpush2.bf16.msra.mxu0 %v986
    %1031 = vmatprep.subr.bf16.mxu0 0
    %1032 = vmatpush2.bf16.msra.mxu0 %v985
    %1033 = vmatprep.subr.bf16.mxu0 0
    %1034 = vmatpush2.bf16.msra.mxu0 %v984
    %1035 = vmatprep.subr.bf16.mxu0 0
    %1036 = vmatpush2.bf16.msra.mxu0 %v983
    %1037 = vmatprep.subr.bf16.mxu0 0
    %1038 = vmatpush2.bf16.msra.mxu0 %v982
    %1039 = vmatprep.subr.bf16.mxu0 0
    %1040 = vmatpush2.bf16.msra.mxu0 %v981
    %1041 = vmatprep.mubr.bf16.mxu0 %v1004
    %1042 = vmatmul.mubr.bf16.gmra.mxu0 %v877
    %v1043 = vpop.f32.mrf.mxu0
    %v1044 = vadd.f32 %v912, %v1043
    %v1045 = vpop.f32.mrf.mxu0
    %v1046 = vpop.f32.mrf.mxu0
    %v1047 = vpop.f32.mrf.mxu0
    %1048 = vdwg.mxu0
    %v1049 = vtanh.pop %v1044
    %v1050 = vpack.c.bf16 %v1049, %v1049
    %v1051 = vld [vmem:[%s4] sm:$0xf]
    %v1052 = vld [vmem:[%s4 + $0x4] sm:$0xf]
    %v1053 = vld [vmem:[%s4 + $0x8] sm:$0xf]
    %v1054 = vld [vmem:[%s4 + $0xc] sm:$0xf]
    %v1055 = vld [vmem:[%s4 + $0x10] sm:$0xf]
    %v1056 = vld [vmem:[%s4 + $0x14] sm:$0xf]
    %v1057 = vld [vmem:[%s4 + $0x18] sm:$0xf]
    %v1058 = vld [vmem:[%s4 + $0x1c] sm:$0xf]
    %v1059 = vld [vmem:[%s4 + $0x20] sm:$0xf]
    %v1060 = vld [vmem:[%s4 + $0x24] sm:$0xf]
    %v1061 = vld [vmem:[%s4 + $0x28] sm:$0xf]
    %v1062 = vld [vmem:[%s4 + $0x2c] sm:$0xf]
    %v1063 = vld [vmem:[%s4 + $0x30] sm:$0xf]
    %v1064 = vld [vmem:[%s4 + $0x34] sm:$0xf]
    %v1065 = vld [vmem:[%s4 + $0x38] sm:$0xf]
    %v1066 = vld [vmem:[%s4 + $0x3c] sm:$0x7]
    %v1067 = vlaneseq
    %v1068 = vshrl.u32 %v1067, 7
    %v1069 = vsub.s32 3, %v1068
    %v1070 = vrot.slane %v66, %v1069
    %v1087 = vunpack.c.l.b16 %v1051
    %v1088 = vunpack.c.l.b16 %v1052
    %v1089 = vunpack.c.l.b16 %v1053
    %v1090 = vunpack.c.l.b16 %v1054
    %v1091 = vunpack.c.l.b16 %v1055
    %v1092 = vunpack.c.l.b16 %v1056
    %v1093 = vunpack.c.l.b16 %v1057
    %v1094 = vunpack.c.l.b16 %v1058
    %v1095 = vunpack.c.l.b16 %v1059
    %v1096 = vunpack.c.l.b16 %v1060
    %v1097 = vunpack.c.l.b16 %v1061
    %v1098 = vunpack.c.l.b16 %v1062
    %v1099 = vunpack.c.l.b16 %v1063
    %v1100 = vunpack.c.l.b16 %v1064
    %v1101 = vunpack.c.l.b16 %v1065
    %v1102 = vunpack.c.l.b16 %v1066
    %v1103 = vpack.c.b16 %v1088, %v1087
    %v1104 = vpack.c.b16 %v1090, %v1089
    %v1105 = vpack.c.b16 %v1092, %v1091
    %v1106 = vpack.c.b16 %v1094, %v1093
    %v1107 = vpack.c.b16 %v1096, %v1095
    %v1108 = vpack.c.b16 %v1098, %v1097
    %v1109 = vpack.c.b16 %v1100, %v1099
    %v1110 = vpack.c.b16 %v1102, %v1101
    %vm1118 = vcmask 1022976
    %v1120 = vsel %vm1118, %v1050, 0
    %vm1122 = vcmask 1046528
    %v1123 = vsel %vm745, 4294967295, 65535
    %v1124 = vsel %vm1122, %v1123, 0
    %v1126 = vand.u32 %v1110, %v1124
    %1128 = vmatprep.subr.bf16.mxu0 0
    %1129 = vmatpush1.bf16.msra.mxu0 %v1126
    %1130 = vmatprep.subr.bf16.mxu0 0
    %1131 = vmatpush1.bf16.msra.mxu0 %v1109
    %1132 = vmatprep.subr.bf16.mxu0 0
    %1133 = vmatpush1.bf16.msra.mxu0 %v1108
    %1134 = vmatprep.subr.bf16.mxu0 0
    %1135 = vmatpush1.bf16.msra.mxu0 %v1107
    %1136 = vmatprep.subr.bf16.mxu0 0
    %1137 = vmatpush1.bf16.msra.mxu0 %v1106
    %1138 = vmatprep.subr.bf16.mxu0 0
    %1139 = vmatpush1.bf16.msra.mxu0 %v1105
    %1140 = vmatprep.subr.bf16.mxu0 0
    %1141 = vmatpush1.bf16.msra.mxu0 %v1104
    %1142 = vmatprep.subr.bf16.mxu0 0
    %1143 = vmatpush1.bf16.msra.mxu0 %v1103
    %1144 = vmatprep.subr.bf16.mxu0 0
    %1145 = vmatpush2.bf16.msra.mxu0 0
    %1146 = vmatprep.subr.bf16.mxu0 0
    %1147 = vmatpush2.bf16.msra.mxu0 0
    %1148 = vmatprep.subr.bf16.mxu0 0
    %1149 = vmatpush2.bf16.msra.mxu0 0
    %1150 = vmatprep.subr.bf16.mxu0 0
    %1151 = vmatpush2.bf16.msra.mxu0 0
    %1152 = vmatprep.subr.bf16.mxu0 0
    %1153 = vmatpush2.bf16.msra.mxu0 0
    %1154 = vmatprep.subr.bf16.mxu0 0
    %1155 = vmatpush2.bf16.msra.mxu0 0
    %1156 = vmatprep.subr.bf16.mxu0 0
    %1157 = vmatpush2.bf16.msra.mxu0 0
    %1158 = vmatprep.subr.bf16.mxu0 0
    %1159 = vmatpush2.bf16.msra.mxu0 0
    %1160 = vmatprep.mubr.bf16.mxu0 0
    %1161 = vmatmul.mubr.bf16.gmra.mxu0 %v1120
    %v1162 = vpop.f32.mrf.mxu0
    %v1163 = vadd.f32 %v1070, %v1162
    %v1164 = vpop.f32.mrf.mxu0
    %v1165 = vpop.f32.mrf.mxu0
    %v1166 = vpop.f32.mrf.mxu0
    %1167 = vdwg.mxu0
    %v1168 = vlaneseq
    %v1169 = vand.u32 %v1168, 127
    %vm1170 = vcmp.eq.s32.totalorder %v1169, 0
    %v1171 = vmax.f32 %v1163, 0.0
    %vm1172 = vcmp.ne.f32.partialorder %v1163, %v1163
    %v1173 = vadd.f32 %v1163, 0.0
    %v1174 = vand.u32 2147483647, %v1163
    %v1175 = vsub.f32 0.0, %v1174
    %v1176 = vmul.f32 %v1175, 1.442695
    %v1177 = vpow.pop %v1176
    %v1178 = vadd.f32 %v1177, 1.0
    %v1179 = vlog2.pop %v1178
    %v1180 = vmul.f32 %v1179, 0.6931472
    %v1181 = vmul.f32 -0.5, %v1177
    %v1182 = vadd.f32 %v1181, 1.0
    %v1183 = vmul.f32 %v1182, %v1177
    %v1184 = vand.u32 2147483647, %v1177
    %vm1185 = vcmp.lt.f32.partialorder %v1184, 0.0004427343
    %v1186 = vsel %vm1185, %v1183, %v1180
    %v1187 = vadd.f32 %v1171, %v1186
    %v1188 = vsel %vm1172, %v1173, %v1187
    %v1189 = vadd.f32 %v1188, 1.0
    %v1190 = vsel %vm1170, %v1163, %v1189
    %vm1191 = vcmask 105472
    %1192 = vst.msk [vmem:[#allocation8] sm:$0xff] %vm1191, %v1190
    // Predicated region
    $region38: #{tpu_custom_call.1} parent=1 // pred_check
      _
    $region39: #{tpu_custom_call.1} parent=1 // pred_check_branch
      %1194 = sbr.rel (0) target = $region41
    $region40: #{tpu_custom_call.1} parent=1 // pred_region
      %s1196 = ssub.s32 128, 128
      %1197 = vsyncadd [#allocation4], %s1196
      %s1199 = sshll.u32 [#allocation8], 4
      %s1200 = int_to_ptr.vmem [resolvable:$true] %s1199
      %1202 = dma.vmem_to_hbm [thread:$0]  %s1200, 128, %s6, [#allocation4]
    $region41: #{tpu_custom_call.1} parent=1 // pred_fallthru
      _
    // Predicated region
    $region42: #{tpu_custom_call.1} parent=1 // pred_check
      _
    $region43: #{tpu_custom_call.1} parent=1 // pred_check_branch
      %1204 = sbr.rel (0) target = $region45
    $region44: #{tpu_custom_call.1} parent=1 // pred_region
      %1205 = dma.done [#allocation4], 128
    $region45: #{tpu_custom_call.1} parent=1 // pred_fallthru
      _
    %1206 = vsyncpa [#allocation3], 1
    %1207 = vsyncpa [#allocation6], 1
    %1208 = vsyncpa [#allocation4], 1

</llo_original>
